<compile_context>
chip_gen: v7x
topology: tpu7x:2x2x1
jax: 0.10.0
libtpu: 0.0.40
codegen_flags: <defaults>
</compile_context>

<pallas_src>
import functools

import numpy as np
import jax
import jax.numpy as jnp
from jax.experimental import pallas as pl
from jax.experimental.pallas import tpu as pltpu


def _joint_max_mse_kernel(p_ref, packed_ref, exp_ref, err_ref, *, h_bits):
    # p_ref:      (TB, H*W)  flattened predicted maps (lane-dense)
    # packed_ref: (1,  H*W)  int32: (col(f) << h_bits) | row00[col(f)]
    # exp_ref:    (TB, 2)    expected (row, col) targets
    # err_ref:    (TB, 1)    per-map squared error (output)
    p = p_ref[...]                                            # (TB, HW)
    gmax = jnp.max(p, axis=1, keepdims=True)                  # (TB, 1)

    # Among positions achieving the per-map global max, take the minimum packed
    # key.  packed is monotone in col first (row00 < 2**h_bits), so this gives
    # the first-occurrence argmax column AND the (0,0)-map row for that column
    # in a single lane reduction.
    sentinel = jnp.int32(jnp.iinfo(jnp.int32).max)
    cand = jnp.where(p == gmax, packed_ref[...], sentinel)    # (TB, HW) int32
    m = jnp.min(cand, axis=1, keepdims=True)                  # (TB, 1) int32

    col = (m >> h_bits).astype(jnp.float32)                   # (TB, 1)
    row = (m & ((1 << h_bits) - 1)).astype(jnp.float32)       # (TB, 1)

    e = exp_ref[...]                                          # (TB, 2)
    d_row = row - e[:, 0:1]
    d_col = col - e[:, 1:2]
    err_ref[...] = d_row * d_row + d_col * d_col              # (TB, 1)


def joint_max_mse_loss(predicted, expected, *, block_maps=None,
                       vmem_budget_bytes=8 * 1024 * 1024):
    """predicted: (N, K, H, W) float, expected: (N, K, 2) float -> scalar f32."""
    N, K, H, W = predicted.shape
    NK = N * K
    HW = H * W

    # Lane-dense flatten (contiguous reshape, essentially free).
    p_flat = predicted.reshape(NK, HW)
    e_flat = expected.reshape(NK, 2).astype(jnp.float32)

    # Hoist the (0, 0)-map per-column argmax-over-H (the arange(1) quirk of the
    # original module): computed once here, not per grid step.
    row00 = jnp.argmax(predicted[0, 0], axis=0).astype(jnp.int32)      # (W,)
    h_bits = max((H - 1).bit_length(), 1)
    col_of_flat = jnp.arange(HW, dtype=jnp.int32) % W                  # (HW,)
    packed = ((col_of_flat << h_bits) | jnp.tile(row00, H)).reshape(1, HW)

    # Block size: as many maps per grid step as fits a conservative VMEM budget
    # (main input is double-buffered), multiple of 8 sublanes.  Budget is kept
    # well under v5e's 16 MiB default scoped VMEM and v7x's 64 MiB physical.
    bytes_per_map = HW * predicted.dtype.itemsize
    if block_maps is None:
        tb = vmem_budget_bytes // (2 * bytes_per_map)
        tb = max(8, min(1024, (tb // 8) * 8))
    else:
        tb = block_maps
    tb = min(tb, ((NK + 7) // 8) * 8)
    nk_pad = ((NK + tb - 1) // tb) * tb
    grid = nk_pad // tb

    if nk_pad != NK:  # pad so every block is full; padded rows sliced off below
        p_flat = jnp.pad(p_flat, ((0, nk_pad - NK), (0, 0)))
        e_flat = jnp.pad(e_flat, ((0, nk_pad - NK), (0, 0)))

    kernel = functools.partial(_joint_max_mse_kernel, h_bits=h_bits)
    per_map_err = pl.pallas_call(
        kernel,
        out_shape=jax.ShapeDtypeStruct((nk_pad, 1), jnp.float32),
        grid=(grid,),
        in_specs=[
            pl.BlockSpec((tb, HW), lambda i: (i, 0)),    # predicted maps
            pl.BlockSpec((1, HW), lambda i: (0, 0)),     # packed (0,0) table, resident
            pl.BlockSpec((tb, 2), lambda i: (i, 0)),     # expected targets
        ],
        out_specs=pl.BlockSpec((tb, 1), lambda i: (i, 0)),
        compiler_params=pltpu.CompilerParams(
            dimension_semantics=("parallel",),
            vmem_limit_bytes=32 * 1024 * 1024,
        ),
    )(p_flat, packed, e_flat)

    # Final mean over all N*K examples (tiny reduction, done in plain JAX).
    return jnp.sum(per_map_err[:NK, 0]) / NK


def _reference_loss(predicted, expected):
    """Pure-JAX replica of the PyTorch forward (including the arange(1) quirk)."""
    maxes = jnp.max(predicted, axis=2)                   # (N, K, W)
    row_i = jnp.argmax(predicted, axis=2)                # (N, K, W)
    col_i = jnp.argmax(maxes, axis=2)                    # (N, K)
    row_i_maxes = row_i[0, 0, col_i][..., None]          # (N, K, 1) <- always map (0,0)
    col_i_maxes = col_i[..., None]                       # (N, K, 1)
    max_indices = jnp.concatenate([row_i_maxes, col_i_maxes],
                                  axis=2).astype(jnp.float32)
    squared_errors = jnp.sum((max_indices - expected) ** 2, axis=2)
    return jnp.mean(squared_errors)


if __name__ == "__main__":
    # NOTE: tie-breaking (first occurrence) matches torch.max(dim)/argmax docs;
    # exact equality on tied float values is not guaranteed across backends,
    # but ties are measure-zero for random continuous inputs.
    N, K, H, W = 2, 4, 16, 16
    key = jax.random.PRNGKey(0)
    k1, k2 = jax.random.split(key)
    predicted = jax.random.normal(k1, (N, K, H, W), dtype=jnp.float32)
    expected = jax.random.uniform(k2, (N, K, 2), dtype=jnp.float32,
                                  minval=0.0, maxval=float(H))

    loss = joint_max_mse_loss(predicted, expected)
    jax.block_until_ready(loss)

    ref = _reference_loss(predicted, expected)
    assert np.allclose(np.asarray(loss), np.asarray(ref), rtol=1e-5, atol=1e-5), (
        float(loss), float(ref))
    print("KERNEL_OK")
</pallas_src>

<mosaic_0001>
module attributes {stable_mosaic.version = 11 : i64} {
  func.func @_joint_max_mse_kernel(%arg0: i32, %arg1: memref<8x256xf32, #tpu.memory_space<vmem>>, %arg2: memref<1x256xi32, #tpu.memory_space<vmem>>, %arg3: memref<8x2xf32, #tpu.memory_space<vmem>>, %arg4: memref<8x1xf32, #tpu.memory_space<vmem>>) attributes {dimension_semantics = [#tpu.dimension_semantics<parallel>], iteration_bounds = array<i64: 1>, scalar_prefetch = 0 : i64, scratch_operands = 0 : i64, tpu.core_type = #tpu.core_type<tc>, window_params = [{transform_indices = @transform_0, window_bounds = array<i64: 8, 256>}, {pipeline_mode = #tpu.pipeline_mode<synchronous>, transform_indices = @transform_1, window_bounds = array<i64: 1, 256>}, {transform_indices = @transform_2, window_bounds = array<i64: 8, 2>}, {transform_indices = @transform_3, window_bounds = array<i64: 8, 1>}]} {
    %c0 = arith.constant 0 : index
    %c0_0 = arith.constant 0 : index
    %0 = vector.load %arg1[%c0, %c0_0] : memref<8x256xf32, #tpu.memory_space<vmem>>, vector<8x256xf32>
    %cst = arith.constant dense<0xFF800000> : vector<8xf32>
    %1 = vector.multi_reduction <maximumf>, %0, %cst [1] : vector<8x256xf32> to vector<8xf32>
    %2 = vector.shape_cast %1 : vector<8xf32> to vector<8x1xf32>
    %3 = vector.broadcast %2 : vector<8x1xf32> to vector<8x256xf32>
    %4 = arith.cmpf oeq, %0, %3 : vector<8x256xf32>
    %c0_1 = arith.constant 0 : index
    %c0_2 = arith.constant 0 : index
    %5 = vector.load %arg2[%c0_1, %c0_2] : memref<1x256xi32, #tpu.memory_space<vmem>>, vector<1x256xi32>
    %c2147483647_i32 = arith.constant 2147483647 : i32
    %6 = vector.shape_cast %5 : vector<1x256xi32> to vector<1x256xi32>
    %7 = vector.broadcast %6 : vector<1x256xi32> to vector<8x256xi32>
    %8 = vector.broadcast %c2147483647_i32 : i32 to vector<8x256xi32>
    %9 = arith.select %4, %7, %8 : vector<8x256xi1>, vector<8x256xi32>
    %cst_3 = arith.constant dense<2147483647> : vector<8xi32>
    %10 = vector.multi_reduction <minsi>, %9, %cst_3 [1] : vector<8x256xi32> to vector<8xi32>
    %11 = vector.shape_cast %10 : vector<8xi32> to vector<8x1xi32>
    %c4_i32 = arith.constant 4 : i32
    %12 = vector.broadcast %c4_i32 : i32 to vector<8x1xi32>
    %13 = arith.shrsi %11, %12 : vector<8x1xi32>
    %14 = arith.sitofp %13 : vector<8x1xi32> to vector<8x1xf32>
    %c15_i32 = arith.constant 15 : i32
    %15 = vector.broadcast %c15_i32 : i32 to vector<8x1xi32>
    %16 = arith.andi %11, %15 : vector<8x1xi32>
    %17 = arith.sitofp %16 : vector<8x1xi32> to vector<8x1xf32>
    %c0_4 = arith.constant 0 : index
    %c0_5 = arith.constant 0 : index
    %18 = vector.load %arg3[%c0_4, %c0_5] : memref<8x2xf32, #tpu.memory_space<vmem>>, vector<8x2xf32>
    %19 = vector.extract_strided_slice %18 {offsets = [0, 0], sizes = [8, 1], strides = [1, 1]} : vector<8x2xf32> to vector<8x1xf32>
    %20 = arith.subf %17, %19 : vector<8x1xf32>
    %21 = vector.extract_strided_slice %18 {offsets = [0, 1], sizes = [8, 1], strides = [1, 1]} : vector<8x2xf32> to vector<8x1xf32>
    %22 = arith.subf %14, %21 : vector<8x1xf32>
    %23 = arith.mulf %20, %20 : vector<8x1xf32>
    %24 = arith.mulf %22, %22 : vector<8x1xf32>
    %25 = arith.addf %23, %24 : vector<8x1xf32>
    %c0_6 = arith.constant 0 : index
    %c0_7 = arith.constant 0 : index
    %26 = vector.load %arg4[%c0_6, %c0_7] : memref<8x1xf32, #tpu.memory_space<vmem>>, vector<8x1xf32>
    tpu.vector_store %arg4[%c0_6, %c0_7], %25 {strides = array<i32>} : memref<8x1xf32, #tpu.memory_space<vmem>>, vector<8x1xf32>,
    return
  }
  func.func @transform_0(%arg0: i32) -> (i32, i32) {
    %c0_i32 = arith.constant 0 : i32
    %c0_i32_0 = arith.constant 0 : i32
    return %arg0, %c0_i32 : i32, i32
  }
  func.func @transform_1(%arg0: i32) -> (i32, i32) {
    %c0_i32 = arith.constant 0 : i32
    %c0_i32_0 = arith.constant 0 : i32
    %c0_i32_1 = arith.constant 0 : i32
    return %c0_i32, %c0_i32_0 : i32, i32
  }
  func.func @transform_2(%arg0: i32) -> (i32, i32) {
    %c0_i32 = arith.constant 0 : i32
    %c0_i32_0 = arith.constant 0 : i32
    return %arg0, %c0_i32 : i32, i32
  }
  func.func @transform_3(%arg0: i32) -> (i32, i32) {
    %c0_i32 = arith.constant 0 : i32
    %c0_i32_0 = arith.constant 0 : i32
    return %arg0, %c0_i32 : i32, i32
  }
}

</mosaic_0001>

<llo_original>
// kernel: tpu_custom_call.1
$region0: #{tpu_custom_call.1}
  #allocation0 [shape = 'u32[]', space=smem, size = 0x4, offset = 0x4, fixed_abs, tag = 'smem constant byte address 0x4 - core index']
  #allocation1 [shape = 'u32[144,128]{1,0:T(1,128)}', space=vmem, size = 0x12000, scoped, tag = 'internal scratch']
  %s0 = inlined_call_operand.hbm [shape: f32[8,256], index: 0, kind: input, shape index: {}]
  %s1 = inlined_call_operand.vmem [shape: s32[1,256], index: 1, kind: input, shape index: {}]
  %s2 = inlined_call_operand.vmem [shape: f32[8,2], index: 2, kind: input, shape index: {}]
  %s3 = inlined_call_operand.vmem [shape: f32[8,1], index: 3, kind: output, shape index: {}]
  %s4 = sld [smem:[#allocation0]]
  $region26: #{tpu_custom_call.1} parent=0
    _
  %s6 = ssub.s32 1, %s4
  %s7 = scalar_select 0, %s6, %s4
  $region1: #{tpu_custom_call.1} parent=0
    #allocation2 [shape = 'u8[8192]{0}', space=vmem, size = 0x2000, scoped, tag = 'input window, operand 0, single buffered']
    #allocation3 [shape = 's32[1]{0}', space=sflag, size = 0x4, scoped, tag = 'scoped memory for tpu_custom_call.1']
    %8 = vsyncpa [#allocation3], 0
    // Predicated region
    $region2: #{tpu_custom_call.1} parent=1 // pred_check
      _
    $region3: #{tpu_custom_call.1} parent=1 // pred_check_branch
      %10 = sbr.rel (0) target = $region5
    $region4: #{tpu_custom_call.1} parent=1 // pred_region
      %s12 = ssub.s32 256, 256
      %13 = vsyncadd [#allocation3], %s12
      %s15 = sshll.u32 [#allocation2], 4
      %s16 = int_to_ptr.vmem [resolvable:$true] %s15
      %18 = dma.hbm_to_vmem [thread:$0]  %s0, 256, %s16, [#allocation3]
    $region5: #{tpu_custom_call.1} parent=1 // pred_fallthru
      _
    // Predicated region
    $region6: #{tpu_custom_call.1} parent=1 // pred_check
      _
    $region7: #{tpu_custom_call.1} parent=1 // pred_check_branch
      %20 = sbr.rel (0) target = $region9
    $region8: #{tpu_custom_call.1} parent=1 // pred_region
      _
    $region9: #{tpu_custom_call.1} parent=1 // pred_fallthru
      _
    // Predicated region
    $region10: #{tpu_custom_call.1} parent=1 // pred_check
      _
    $region11: #{tpu_custom_call.1} parent=1 // pred_check_branch
      %22 = sbr.rel (0) target = $region13
    $region12: #{tpu_custom_call.1} parent=1 // pred_region
      _
    $region13: #{tpu_custom_call.1} parent=1 // pred_fallthru
      _
    // Predicated region
    $region14: #{tpu_custom_call.1} parent=1 // pred_check
      _
    $region15: #{tpu_custom_call.1} parent=1 // pred_check_branch
      %24 = sbr.rel (0) target = $region17
    $region16: #{tpu_custom_call.1} parent=1 // pred_region
      %25 = dma.done [#allocation3], 256
    $region17: #{tpu_custom_call.1} parent=1 // pred_fallthru
      _
    %v26 = vld [vmem:[#allocation2] sm:$0xff]
    %v27 = vld [vmem:[#allocation2 + $0x8] sm:$0xff]
    %v28 = vmax.f32 %v26, %v27
    %29 = vmax.xlane.f32.xlu0 %v28
    %v30 = vpop.xlane.xlu0 %29
    %vm31 = vcmp.eq.f32.partialorder %v26, %v30
    %vm32 = vcmp.eq.f32.partialorder %v27, %v30
    %v33 = vld [vmem:[%s1] sm:$0x3]
    %v34 = vlaneseq
    %v35 = vshrl.u32 %v34, 7
    %v36 = vsub.s32 0, %v35
    %v37 = vrot.slane %v33, %v36
    %v38 = vlaneseq
    %v39 = vshrl.u32 %v38, 7
    %v40 = vsub.s32 1, %v39
    %v41 = vrot.slane %v33, %v40
    %v42 = vsel %vm31, %v37, 2147483647
    %v43 = vsel %vm32, %v41, 2147483647
    %vm44 = vcmp.lt.s32.totalorder %v42, %v43
    %v45 = vsel %vm44, %v42, %v43
    %v46 = vand.u32 %v45, 65535
    %v47 = vshra.s32 %v45, 16
    %v48 = vcvt.s32.f32 %v46
    %v49 = vcvt.s32.f32 %v47
    %50 = vmin.xlane.f32.xlu0 %v49
    %v51 = vpop.xlane.xlu0 %50
    %vm52 = vcmp.eq.f32.partialorder %v49, %v51
    %v53 = vsel %vm52, %v48, inf
    %54 = vmin.xlane.f32.xlu0 %v53
    %v55 = vpop.xlane.xlu0 %54
    %v56 = vcvt.f32.s32 %v55
    %v57 = vcvt.f32.s32 %v51
    %v58 = vshll.u32 %v57, 16
    %v59 = vadd.s32 %v58, %v56
    %v60 = vshra.s32 %v59, 4
    %v61 = vcvt.s32.f32 %v60
    %v62 = vand.u32 %v59, 15
    %v63 = vcvt.s32.f32 %v62
    %v64 = vld [vmem:[%s2] sm:$0xff]
    %v65 = vsub.f32 %v63, %v64
    %v66 = vsub.f32 %v61, %v64
    %v67 = vmul.f32 %v65, %v65
    %v68 = vmul.f32 %v66, %v66
    %70 = vrot.lane.b32.xlu0 %v68, 127
    %v71 = vpop.permute.xlu0 %70
    %v73 = vadd.f32 %v67, %v71
    %vm74 = vcmask 7168
    %75 = vst.msk [vmem:[%s3] sm:$0xff] %vm74, %v73
    // Predicated region
    $region18: #{tpu_custom_call.1} parent=1 // pred_check
      _
    $region19: #{tpu_custom_call.1} parent=1 // pred_check_branch
      %77 = sbr.rel (0) target = $region21
    $region20: #{tpu_custom_call.1} parent=1 // pred_region
      _
    $region21: #{tpu_custom_call.1} parent=1 // pred_fallthru
      _
    // Predicated region
    $region22: #{tpu_custom_call.1} parent=1 // pred_check
      _
    $region23: #{tpu_custom_call.1} parent=1 // pred_check_branch
      %79 = sbr.rel (0) target = $region25
    $region24: #{tpu_custom_call.1} parent=1 // pred_region
      _
    $region25: #{tpu_custom_call.1} parent=1 // pred_fallthru
      _
    %80 = vsyncpa [#allocation3], 1

</llo_original>
